<compile_context>
chip_gen: v7x
topology: tpu7x:2x2x1
jax: 0.10.0
libtpu: 0.0.40
codegen_flags: <defaults>
</compile_context>

<pallas_src>
import functools

import jax
import jax.numpy as jnp
from jax.experimental import pallas as pl
from jax.experimental.pallas import tpu as pltpu


# --------------------------------------------------------------------------
# Kernels.  Blocks keep the native (batch, time, channel) layout.
# --------------------------------------------------------------------------
def _revin_norm_kernel(*refs, eps, affine, subtract_last):
    if affine:
        x_ref, w_ref, b_ref, xn_ref, stats_ref = refs
    else:
        x_ref, xn_ref, stats_ref = refs

    x = x_ref[...]                                            # (TB, T, C)
    mean = jnp.mean(x, axis=1, keepdims=True)                 # (TB, 1, C)
    var = jnp.mean((x - mean) ** 2, axis=1, keepdims=True)    # unbiased=False
    stdev = jnp.sqrt(var + eps)                               # (TB, 1, C)
    anchor = x[:, -1:, :] if subtract_last else mean          # 'last' or 'mean'

    inv_std = 1.0 / stdev                                     # tiny per-(b,c) recip
    xn = (x - anchor) * inv_std                               # mul, not div
    if affine:                                                # fused affine
        xn = xn * w_ref[...] + b_ref[...]                     # (1,C) broadcast
    xn_ref[...] = xn
    # packed stats: row 0 = stdev, row 1 = anchor (mean or last)
    stats_ref[...] = jnp.concatenate([stdev, anchor], axis=1)  # (TB, 2, C)


def _revin_denorm_kernel(*refs, eps, affine):
    if affine:
        y_ref, stats_ref, w_ref, b_ref, out_ref = refs
    else:
        y_ref, stats_ref, out_ref = refs

    y = y_ref[...]                                            # (TB, P, C)
    stats = stats_ref[...]                                    # (TB, 2, C)
    stdev = stats[:, 0:1, :]
    anchor = stats[:, 1:2, :]
    if affine:
        inv_w = 1.0 / (w_ref[...] + eps * eps)                # (1, C) recip
        y = (y - b_ref[...]) * inv_w
    out_ref[...] = y * stdev + anchor


# --------------------------------------------------------------------------
# Tiling helpers.
# --------------------------------------------------------------------------
def _pick_tile_b(B, T, C, target_bytes=4 << 20):
    """Largest divisor of B whose (tb, T, C) f32 block is <= target_bytes."""
    per_batch = T * C * 4
    cap = max(1, target_bytes // per_batch)
    if B <= cap:
        return B
    tb = 1
    for d in range(1, int(cap) + 1):
        if B % d == 0:
            tb = d
    return tb


_VMEM_LIMIT = 32 * 1024 * 1024  # safe on v5e/v6e/v7x; blocks are sized to fit


def make_revin(num_features, eps=1e-5, affine=True, subtract_last=False):
    """Returns jitted (norm, denorm) functions mirroring RevIN.forward."""
    C = num_features
    norm_kernel = functools.partial(_revin_norm_kernel, eps=eps,
                                    affine=affine, subtract_last=subtract_last)
    denorm_kernel = functools.partial(_revin_denorm_kernel, eps=eps,
                                      affine=affine)
    cparams = pltpu.CompilerParams(dimension_semantics=("parallel",),
                                   vmem_limit_bytes=_VMEM_LIMIT)

    @jax.jit
    def norm(x, weight, bias):
        B, T, _ = x.shape
        tb = _pick_tile_b(B, T, C)
        grid = (B // tb,)

        in_specs = [pl.BlockSpec((tb, T, C), lambda i: (i, 0, 0))]
        args = [x]
        if affine:
            in_specs += [pl.BlockSpec((1, C), lambda i: (0, 0)),
                         pl.BlockSpec((1, C), lambda i: (0, 0))]
            args += [weight.reshape(1, C), bias.reshape(1, C)]

        xn, stats = pl.pallas_call(
            norm_kernel,
            grid=grid,
            in_specs=in_specs,
            out_specs=(pl.BlockSpec((tb, T, C), lambda i: (i, 0, 0)),
                       pl.BlockSpec((tb, 2, C), lambda i: (i, 0, 0))),
            out_shape=(jax.ShapeDtypeStruct((B, T, C), jnp.float32),
                       jax.ShapeDtypeStruct((B, 2, C), jnp.float32)),
            compiler_params=cparams,
        )(*args)
        return xn, stats                                      # stats: (B, 2, C) packed

    @jax.jit
    def denorm(y, stats, weight, bias):
        B, P, _ = y.shape
        tb = _pick_tile_b(B, P, C)
        grid = (B // tb,)

        in_specs = [pl.BlockSpec((tb, P, C), lambda i: (i, 0, 0)),
                    pl.BlockSpec((tb, 2, C), lambda i: (i, 0, 0))]
        args = [y, stats]
        if affine:
            in_specs += [pl.BlockSpec((1, C), lambda i: (0, 0)),
                         pl.BlockSpec((1, C), lambda i: (0, 0))]
            args += [weight.reshape(1, C), bias.reshape(1, C)]

        out = pl.pallas_call(
            denorm_kernel,
            grid=grid,
            in_specs=in_specs,
            out_specs=pl.BlockSpec((tb, P, C), lambda i: (i, 0, 0)),
            out_shape=jax.ShapeDtypeStruct((B, P, C), jnp.float32),
            compiler_params=cparams,
        )(*args)
        return out

    return norm, denorm


class RevIN:
    """JAX/Pallas mirror of the PyTorch RevIN module: __call__(x, mode)."""

    def __init__(self, num_features, eps=1e-5, affine=True, subtract_last=False):
        self.num_features = num_features
        self.eps = eps
        self.affine = affine
        self.subtract_last = subtract_last
        # fresh torch init: weight=1, bias=0 (only used when affine=True)
        self.affine_weight = jnp.ones((num_features,), jnp.float32)
        self.affine_bias = jnp.zeros((num_features,), jnp.float32)
        self._norm_fn, self._denorm_fn = make_revin(
            num_features, eps=eps, affine=affine, subtract_last=subtract_last)
        self._stats = None   # packed (B, 2, C): [stdev; mean-or-last]

    def __call__(self, x, mode):
        if mode == 'norm':
            y, self._stats = self._norm_fn(x, self.affine_weight, self.affine_bias)
            return y
        elif mode == 'denorm':
            if self._stats is None:
                raise ValueError("denorm called before norm")
            return self._denorm_fn(x, self._stats,
                                   self.affine_weight, self.affine_bias)
        else:
            raise NotImplementedError(mode)


# --------------------------------------------------------------------------
# Pure-JAX reference of the torch math (for correctness check).
# --------------------------------------------------------------------------
def _ref_norm(x, weight, bias, eps, affine, subtract_last):
    mean = jnp.mean(x, axis=1, keepdims=True)
    var = jnp.var(x, axis=1, keepdims=True)                   # ddof=0
    stdev = jnp.sqrt(var + eps)
    anchor = x[:, -1:, :] if subtract_last else mean
    y = (x - anchor) / stdev
    if affine:
        y = y * weight + bias
    return y, (stdev, anchor)


def _ref_denorm(y, stdev, anchor, weight, bias, eps, affine):
    if affine:
        y = (y - bias) / (weight + eps * eps)
    return y * stdev + anchor


if __name__ == "__main__":
    B, L, C, PRED = 2, 96, 3, 48
    key = jax.random.PRNGKey(0)
    kx, ky, kw, kb = jax.random.split(key, 4)
    x = 2.0 * jax.random.normal(kx, (B, L, C), jnp.float32) + 0.5
    y_pred = jax.random.normal(ky, (B, PRED, C), jnp.float32)

    configs = [
        dict(affine=True, subtract_last=False),   # module defaults
        dict(affine=False, subtract_last=True),   # PETformer usage
    ]
    for cfg in configs:
        rev = RevIN(C, eps=1e-5, **cfg)
        if cfg["affine"]:
            # exercise the affine path with non-trivial learnable params
            rev.affine_weight = 1.0 + 0.1 * jax.random.normal(kw, (C,), jnp.float32)
            rev.affine_bias = 0.1 * jax.random.normal(kb, (C,), jnp.float32)

        xn = jax.block_until_ready(rev(x, 'norm'))
        out = jax.block_until_ready(rev(y_pred, 'denorm'))

        xn_ref, stats_ref = _ref_norm(x, rev.affine_weight, rev.affine_bias,
                                      rev.eps, cfg["affine"], cfg["subtract_last"])
        out_ref = _ref_denorm(y_pred, stats_ref[0], stats_ref[1],
                              rev.affine_weight, rev.affine_bias,
                              rev.eps, cfg["affine"])

        assert xn.shape == (B, L, C) and out.shape == (B, PRED, C)
        assert bool(jnp.all(jnp.isfinite(xn))) and bool(jnp.all(jnp.isfinite(out)))
        assert bool(jnp.allclose(xn, xn_ref, atol=1e-4, rtol=1e-4))
        assert bool(jnp.allclose(out, out_ref, atol=1e-4, rtol=1e-4))

        # packed stats match the torch attributes (stdev / mean-or-last)
        stdev_pk = rev._stats[:, 0:1, :]
        anchor_pk = rev._stats[:, 1:2, :]
        assert bool(jnp.allclose(stdev_pk, stats_ref[0], atol=1e-5, rtol=1e-5))
        assert bool(jnp.allclose(anchor_pk, stats_ref[1], atol=1e-5, rtol=1e-5))

    print("KERNEL_OK")
</pallas_src>

<mosaic_0001>
module attributes {stable_mosaic.version = 11 : i64} {
  func.func @_revin_norm_kernel(%arg0: i32, %arg1: memref<2x96x3xf32, #tpu.memory_space<vmem>>, %arg2: memref<1x3xf32, #tpu.memory_space<vmem>>, %arg3: memref<1x3xf32, #tpu.memory_space<vmem>>, %arg4: memref<2x96x3xf32, #tpu.memory_space<vmem>>, %arg5: memref<2x2x3xf32, #tpu.memory_space<vmem>>) attributes {dimension_semantics = [#tpu.dimension_semantics<parallel>], iteration_bounds = array<i64: 1>, scalar_prefetch = 0 : i64, scratch_operands = 0 : i64, tpu.core_type = #tpu.core_type<tc>, window_params = [{transform_indices = @transform_0, window_bounds = array<i64: 2, 96, 3>}, {pipeline_mode = #tpu.pipeline_mode<synchronous>, transform_indices = @transform_1, window_bounds = array<i64: 1, 3>}, {pipeline_mode = #tpu.pipeline_mode<synchronous>, transform_indices = @transform_2, window_bounds = array<i64: 1, 3>}, {transform_indices = @transform_3, window_bounds = array<i64: 2, 96, 3>}, {transform_indices = @transform_4, window_bounds = array<i64: 2, 2, 3>}]} {
    %c0 = arith.constant 0 : index
    %c0_0 = arith.constant 0 : index
    %c0_1 = arith.constant 0 : index
    %0 = vector.load %arg1[%c0, %c0_0, %c0_1] : memref<2x96x3xf32, #tpu.memory_space<vmem>>, vector<2x96x3xf32>
    %cst = arith.constant dense<0.000000e+00> : vector<2x3xf32>
    %1 = vector.multi_reduction <add>, %0, %cst [1] : vector<2x96x3xf32> to vector<2x3xf32>
    %2 = vector.shape_cast %1 : vector<2x3xf32> to vector<2x1x3xf32>
    %cst_2 = arith.constant 9.600000e+01 : f32
    %3 = vector.broadcast %cst_2 : f32 to vector<2x1x3xf32>
    %4 = arith.divf %2, %3 : vector<2x1x3xf32>
    %5 = vector.broadcast %4 : vector<2x1x3xf32> to vector<2x96x3xf32>
    %6 = arith.subf %0, %5 : vector<2x96x3xf32>
    %7 = arith.mulf %6, %6 : vector<2x96x3xf32>
    %cst_3 = arith.constant dense<0.000000e+00> : vector<2x3xf32>
    %8 = vector.multi_reduction <add>, %7, %cst_3 [1] : vector<2x96x3xf32> to vector<2x3xf32>
    %9 = vector.shape_cast %8 : vector<2x3xf32> to vector<2x1x3xf32>
    %cst_4 = arith.constant 9.600000e+01 : f32
    %10 = vector.broadcast %cst_4 : f32 to vector<2x1x3xf32>
    %11 = arith.divf %9, %10 : vector<2x1x3xf32>
    %cst_5 = arith.constant 9.99999974E-6 : f32
    %12 = vector.broadcast %cst_5 : f32 to vector<2x1x3xf32>
    %13 = arith.addf %11, %12 : vector<2x1x3xf32>
    %14 = math.sqrt %13 : vector<2x1x3xf32>
    %cst_6 = arith.constant 1.000000e+00 : f32
    %15 = vector.broadcast %cst_6 : f32 to vector<2x1x3xf32>
    %16 = arith.divf %15, %14 : vector<2x1x3xf32>
    %17 = vector.broadcast %4 : vector<2x1x3xf32> to vector<2x96x3xf32>
    %18 = arith.subf %0, %17 : vector<2x96x3xf32>
    %19 = vector.broadcast %16 : vector<2x1x3xf32> to vector<2x96x3xf32>
    %20 = arith.mulf %18, %19 : vector<2x96x3xf32>
    %c0_7 = arith.constant 0 : index
    %c0_8 = arith.constant 0 : index
    %21 = vector.load %arg2[%c0_7, %c0_8] : memref<1x3xf32, #tpu.memory_space<vmem>>, vector<1x3xf32>
    %22 = vector.shape_cast %21 : vector<1x3xf32> to vector<1x1x3xf32>
    %23 = vector.broadcast %22 : vector<1x1x3xf32> to vector<2x96x3xf32>
    %24 = arith.mulf %20, %23 : vector<2x96x3xf32>
    %c0_9 = arith.constant 0 : index
    %c0_10 = arith.constant 0 : index
    %25 = vector.load %arg3[%c0_9, %c0_10] : memref<1x3xf32, #tpu.memory_space<vmem>>, vector<1x3xf32>
    %26 = vector.shape_cast %25 : vector<1x3xf32> to vector<1x1x3xf32>
    %27 = vector.broadcast %26 : vector<1x1x3xf32> to vector<2x96x3xf32>
    %28 = arith.addf %24, %27 : vector<2x96x3xf32>
    %c0_11 = arith.constant 0 : index
    %c0_12 = arith.constant 0 : index
    %c0_13 = arith.constant 0 : index
    %29 = vector.load %arg4[%c0_11, %c0_12, %c0_13] : memref<2x96x3xf32, #tpu.memory_space<vmem>>, vector<2x96x3xf32>
    tpu.vector_store %arg4[%c0_11, %c0_12, %c0_13], %28 {strides = array<i32>} : memref<2x96x3xf32, #tpu.memory_space<vmem>>, vector<2x96x3xf32>,
    %30 = tpu.concatenate %14, %4 in 1 : vector<2x1x3xf32>, vector<2x1x3xf32> -> vector<2x2x3xf32>
    %c0_14 = arith.constant 0 : index
    %c0_15 = arith.constant 0 : index
    %c0_16 = arith.constant 0 : index
    %31 = vector.load %arg5[%c0_14, %c0_15, %c0_16] : memref<2x2x3xf32, #tpu.memory_space<vmem>>, vector<2x2x3xf32>
    tpu.vector_store %arg5[%c0_14, %c0_15, %c0_16], %30 {strides = array<i32>} : memref<2x2x3xf32, #tpu.memory_space<vmem>>, vector<2x2x3xf32>,
    return
  }
  func.func @transform_0(%arg0: i32) -> (i32, i32, i32) {
    %c0_i32 = arith.constant 0 : i32
    %c0_i32_0 = arith.constant 0 : i32
    %c0_i32_1 = arith.constant 0 : i32
    return %arg0, %c0_i32, %c0_i32_0 : i32, i32, i32
  }
  func.func @transform_1(%arg0: i32) -> (i32, i32) {
    %c0_i32 = arith.constant 0 : i32
    %c0_i32_0 = arith.constant 0 : i32
    %c0_i32_1 = arith.constant 0 : i32
    return %c0_i32, %c0_i32_0 : i32, i32
  }
  func.func @transform_2(%arg0: i32) -> (i32, i32) {
    %c0_i32 = arith.constant 0 : i32
    %c0_i32_0 = arith.constant 0 : i32
    %c0_i32_1 = arith.constant 0 : i32
    return %c0_i32, %c0_i32_0 : i32, i32
  }
  func.func @transform_3(%arg0: i32) -> (i32, i32, i32) {
    %c0_i32 = arith.constant 0 : i32
    %c0_i32_0 = arith.constant 0 : i32
    %c0_i32_1 = arith.constant 0 : i32
    return %arg0, %c0_i32, %c0_i32_0 : i32, i32, i32
  }
  func.func @transform_4(%arg0: i32) -> (i32, i32, i32) {
    %c0_i32 = arith.constant 0 : i32
    %c0_i32_0 = arith.constant 0 : i32
    %c0_i32_1 = arith.constant 0 : i32
    return %arg0, %c0_i32, %c0_i32_0 : i32, i32, i32
  }
}

</mosaic_0001>

<llo_original>
// kernel: norm.1
$region0: #{norm.1}
  #allocation0 [shape = 'u32[]', space=smem, size = 0x4, offset = 0x4, fixed_abs, tag = 'smem constant byte address 0x4 - core index']
  #allocation1 [shape = 'u32[144,128]{1,0:T(1,128)}', space=vmem, size = 0x12000, scoped, tag = 'internal scratch']
  %s0 = inlined_call_operand.vmem [shape: f32[2,96,3], index: 0, kind: input, shape index: {}]
  %s1 = inlined_call_operand.vmem [shape: f32[1,3], index: 1, kind: input, shape index: {}]
  %s2 = inlined_call_operand.vmem [shape: f32[1,3], index: 2, kind: input, shape index: {}]
  %s3 = inlined_call_operand.vmem [shape: f32[2,96,3], index: 3, kind: output, shape index: {0}]
  %s4 = inlined_call_operand.hbm [shape: f32[2,2,3], index: 4, kind: output, shape index: {1}]
  %5 = xla_tuple %s3, %s4
  %s6 = sld [smem:[#allocation0]]
  $region30: #{norm.1} parent=0
    _
  %s8 = ssub.s32 1, %s6
  %s9 = scalar_select 0, %s8, %s6
  $region1: #{norm.1} parent=0
    #allocation2 [shape = 'u8[2048]{0}', space=vmem, size = 0x800, scoped, tag = 'output window, operand 1, single buffered']
    #allocation3 [shape = 's32[1]{0}', space=sflag, size = 0x4, scoped, tag = 'scoped memory for norm.1']
    %10 = vsyncpa [#allocation3], 0
    // Predicated region
    $region2: #{norm.1} parent=1 // pred_check
      _
    $region3: #{norm.1} parent=1 // pred_check_branch
      %12 = sbr.rel (0) target = $region5
    $region4: #{norm.1} parent=1 // pred_region
      _
    $region5: #{norm.1} parent=1 // pred_fallthru
      _
    // Predicated region
    $region6: #{norm.1} parent=1 // pred_check
      _
    $region7: #{norm.1} parent=1 // pred_check_branch
      %14 = sbr.rel (0) target = $region9
    $region8: #{norm.1} parent=1 // pred_region
      _
    $region9: #{norm.1} parent=1 // pred_fallthru
      _
    // Predicated region
    $region10: #{norm.1} parent=1 // pred_check
      _
    $region11: #{norm.1} parent=1 // pred_check_branch
      %16 = sbr.rel (0) target = $region13
    $region12: #{norm.1} parent=1 // pred_region
      _
    $region13: #{norm.1} parent=1 // pred_fallthru
      _
    %v17 = vld [vmem:[%s0] sm:$0xff]
    %v18 = vld [vmem:[%s0 + $0x8] sm:$0xff]
    %v19 = vld [vmem:[%s0 + $0x10] sm:$0xff]
    %v20 = vld [vmem:[%s0 + $0x18] sm:$0xff]
    %v21 = vld [vmem:[%s0 + $0x20] sm:$0xff]
    %v22 = vld [vmem:[%s0 + $0x28] sm:$0xff]
    %v23 = vld [vmem:[%s0 + $0x30] sm:$0xff]
    %v24 = vld [vmem:[%s0 + $0x38] sm:$0xff]
    %v25 = vld [vmem:[%s0 + $0x40] sm:$0xff]
    %v26 = vld [vmem:[%s0 + $0x48] sm:$0xff]
    %v27 = vld [vmem:[%s0 + $0x50] sm:$0xff]
    %v28 = vld [vmem:[%s0 + $0x58] sm:$0xff]
    %v29 = vld [vmem:[%s0 + $0x60] sm:$0xff]
    %v30 = vld [vmem:[%s0 + $0x68] sm:$0xff]
    %v31 = vld [vmem:[%s0 + $0x70] sm:$0xff]
    %v32 = vld [vmem:[%s0 + $0x78] sm:$0xff]
    %v33 = vld [vmem:[%s0 + $0x80] sm:$0xff]
    %v34 = vld [vmem:[%s0 + $0x88] sm:$0xff]
    %v35 = vld [vmem:[%s0 + $0x90] sm:$0xff]
    %v36 = vld [vmem:[%s0 + $0x98] sm:$0xff]
    %v37 = vld [vmem:[%s0 + $0xa0] sm:$0xff]
    %v38 = vld [vmem:[%s0 + $0xa8] sm:$0xff]
    %v39 = vld [vmem:[%s0 + $0xb0] sm:$0xff]
    %v40 = vld [vmem:[%s0 + $0xb8] sm:$0xff]
    %vm41 = vcmask 23552
    %v42 = vsel %vm41, %v17, 0.0
    %v43 = vsel %vm41, %v18, 0.0
    %v44 = vadd.f32 %v42, %v43
    %v45 = vsel %vm41, %v19, 0.0
    %v46 = vadd.f32 %v44, %v45
    %v47 = vsel %vm41, %v20, 0.0
    %v48 = vadd.f32 %v46, %v47
    %v49 = vsel %vm41, %v21, 0.0
    %v50 = vadd.f32 %v48, %v49
    %v51 = vsel %vm41, %v22, 0.0
    %v52 = vadd.f32 %v50, %v51
    %v53 = vsel %vm41, %v23, 0.0
    %v54 = vadd.f32 %v52, %v53
    %v55 = vsel %vm41, %v24, 0.0
    %v56 = vadd.f32 %v54, %v55
    %v57 = vsel %vm41, %v25, 0.0
    %v58 = vadd.f32 %v56, %v57
    %v59 = vsel %vm41, %v26, 0.0
    %v60 = vadd.f32 %v58, %v59
    %v61 = vsel %vm41, %v27, 0.0
    %v62 = vadd.f32 %v60, %v61
    %v63 = vsel %vm41, %v28, 0.0
    %v64 = vadd.f32 %v62, %v63
    %v65 = vrot.slane %v64, 4
    %v66 = vadd.f32 %v64, %v65
    %v67 = vrot.slane %v66, 2
    %v68 = vadd.f32 %v66, %v67
    %v69 = vrot.slane %v68, 1
    %v70 = vadd.f32 %v68, %v69
    %v71 = vsel %vm41, %v29, 0.0
    %v72 = vsel %vm41, %v30, 0.0
    %v73 = vadd.f32 %v71, %v72
    %v74 = vsel %vm41, %v31, 0.0
    %v75 = vadd.f32 %v73, %v74
    %v76 = vsel %vm41, %v32, 0.0
    %v77 = vadd.f32 %v75, %v76
    %v78 = vsel %vm41, %v33, 0.0
    %v79 = vadd.f32 %v77, %v78
    %v80 = vsel %vm41, %v34, 0.0
    %v81 = vadd.f32 %v79, %v80
    %v82 = vsel %vm41, %v35, 0.0
    %v83 = vadd.f32 %v81, %v82
    %v84 = vsel %vm41, %v36, 0.0
    %v85 = vadd.f32 %v83, %v84
    %v86 = vsel %vm41, %v37, 0.0
    %v87 = vadd.f32 %v85, %v86
    %v88 = vsel %vm41, %v38, 0.0
    %v89 = vadd.f32 %v87, %v88
    %v90 = vsel %vm41, %v39, 0.0
    %v91 = vadd.f32 %v89, %v90
    %v92 = vsel %vm41, %v40, 0.0
    %v93 = vadd.f32 %v91, %v92
    %v94 = vrot.slane %v93, 4
    %v95 = vadd.f32 %v93, %v94
    %v96 = vrot.slane %v95, 2
    %v97 = vadd.f32 %v95, %v96
    %v98 = vrot.slane %v97, 1
    %v99 = vadd.f32 %v97, %v98
    %v100 = vrcp.pop 96.0
    %v101 = vmul.f32 %v70, %v100
    %v102 = vmul.f32 %v99, %v100
    %v103 = vsub.f32 %v17, %v101
    %v104 = vsub.f32 %v18, %v101
    %v105 = vsub.f32 %v19, %v101
    %v106 = vsub.f32 %v20, %v101
    %v107 = vsub.f32 %v21, %v101
    %v108 = vsub.f32 %v22, %v101
    %v109 = vsub.f32 %v23, %v101
    %v110 = vsub.f32 %v24, %v101
    %v111 = vsub.f32 %v25, %v101
    %v112 = vsub.f32 %v26, %v101
    %v113 = vsub.f32 %v27, %v101
    %v114 = vsub.f32 %v28, %v101
    %v115 = vsub.f32 %v29, %v102
    %v116 = vsub.f32 %v30, %v102
    %v117 = vsub.f32 %v31, %v102
    %v118 = vsub.f32 %v32, %v102
    %v119 = vsub.f32 %v33, %v102
    %v120 = vsub.f32 %v34, %v102
    %v121 = vsub.f32 %v35, %v102
    %v122 = vsub.f32 %v36, %v102
    %v123 = vsub.f32 %v37, %v102
    %v124 = vsub.f32 %v38, %v102
    %v125 = vsub.f32 %v39, %v102
    %v126 = vsub.f32 %v40, %v102
    %v127 = vmul.f32 %v103, %v103
    %v128 = vmul.f32 %v104, %v104
    %v129 = vmul.f32 %v105, %v105
    %v130 = vmul.f32 %v106, %v106
    %v131 = vmul.f32 %v107, %v107
    %v132 = vmul.f32 %v108, %v108
    %v133 = vmul.f32 %v109, %v109
    %v134 = vmul.f32 %v110, %v110
    %v135 = vmul.f32 %v111, %v111
    %v136 = vmul.f32 %v112, %v112
    %v137 = vmul.f32 %v113, %v113
    %v138 = vmul.f32 %v114, %v114
    %v139 = vmul.f32 %v115, %v115
    %v140 = vmul.f32 %v116, %v116
    %v141 = vmul.f32 %v117, %v117
    %v142 = vmul.f32 %v118, %v118
    %v143 = vmul.f32 %v119, %v119
    %v144 = vmul.f32 %v120, %v120
    %v145 = vmul.f32 %v121, %v121
    %v146 = vmul.f32 %v122, %v122
    %v147 = vmul.f32 %v123, %v123
    %v148 = vmul.f32 %v124, %v124
    %v149 = vmul.f32 %v125, %v125
    %v150 = vmul.f32 %v126, %v126
    %v151 = vsel %vm41, %v127, 0.0
    %v152 = vsel %vm41, %v128, 0.0
    %v153 = vadd.f32 %v151, %v152
    %v154 = vsel %vm41, %v129, 0.0
    %v155 = vadd.f32 %v153, %v154
    %v156 = vsel %vm41, %v130, 0.0
    %v157 = vadd.f32 %v155, %v156
    %v158 = vsel %vm41, %v131, 0.0
    %v159 = vadd.f32 %v157, %v158
    %v160 = vsel %vm41, %v132, 0.0
    %v161 = vadd.f32 %v159, %v160
    %v162 = vsel %vm41, %v133, 0.0
    %v163 = vadd.f32 %v161, %v162
    %v164 = vsel %vm41, %v134, 0.0
    %v165 = vadd.f32 %v163, %v164
    %v166 = vsel %vm41, %v135, 0.0
    %v167 = vadd.f32 %v165, %v166
    %v168 = vsel %vm41, %v136, 0.0
    %v169 = vadd.f32 %v167, %v168
    %v170 = vsel %vm41, %v137, 0.0
    %v171 = vadd.f32 %v169, %v170
    %v172 = vsel %vm41, %v138, 0.0
    %v173 = vadd.f32 %v171, %v172
    %v174 = vrot.slane %v173, 4
    %v175 = vadd.f32 %v173, %v174
    %v176 = vrot.slane %v175, 2
    %v177 = vadd.f32 %v175, %v176
    %v178 = vrot.slane %v177, 1
    %v179 = vadd.f32 %v177, %v178
    %v180 = vsel %vm41, %v139, 0.0
    %v181 = vsel %vm41, %v140, 0.0
    %v182 = vadd.f32 %v180, %v181
    %v183 = vsel %vm41, %v141, 0.0
    %v184 = vadd.f32 %v182, %v183
    %v185 = vsel %vm41, %v142, 0.0
    %v186 = vadd.f32 %v184, %v185
    %v187 = vsel %vm41, %v143, 0.0
    %v188 = vadd.f32 %v186, %v187
    %v189 = vsel %vm41, %v144, 0.0
    %v190 = vadd.f32 %v188, %v189
    %v191 = vsel %vm41, %v145, 0.0
    %v192 = vadd.f32 %v190, %v191
    %v193 = vsel %vm41, %v146, 0.0
    %v194 = vadd.f32 %v192, %v193
    %v195 = vsel %vm41, %v147, 0.0
    %v196 = vadd.f32 %v194, %v195
    %v197 = vsel %vm41, %v148, 0.0
    %v198 = vadd.f32 %v196, %v197
    %v199 = vsel %vm41, %v149, 0.0
    %v200 = vadd.f32 %v198, %v199
    %v201 = vsel %vm41, %v150, 0.0
    %v202 = vadd.f32 %v200, %v201
    %v203 = vrot.slane %v202, 4
    %v204 = vadd.f32 %v202, %v203
    %v205 = vrot.slane %v204, 2
    %v206 = vadd.f32 %v204, %v205
    %v207 = vrot.slane %v206, 1
    %v208 = vadd.f32 %v206, %v207
    %v209 = vmul.f32 %v179, %v100
    %v210 = vmul.f32 %v208, %v100
    %v211 = vadd.f32 %v209, 1e-05
    %v212 = vadd.f32 %v210, 1e-05
    %v213 = vrsqrt.pop %v211
    %v214 = vmul.f32 %v211, %v213
    %vm215 = vcmp.eq.f32.partialorder %v211, inf
    %v216 = vsel %vm215, %v211, %v214
    %vm217 = vcmp.eq.f32.partialorder %v211, 0.0
    %v218 = vand.u32 %v211, 2147483648
    %v219 = vsel %vm217, %v218, %v216
    %v220 = vrsqrt.pop %v212
    %v221 = vmul.f32 %v212, %v220
    %vm222 = vcmp.eq.f32.partialorder %v212, inf
    %v223 = vsel %vm222, %v212, %v221
    %vm224 = vcmp.eq.f32.partialorder %v212, 0.0
    %v225 = vand.u32 %v212, 2147483648
    %v226 = vsel %vm224, %v225, %v223
    %v227 = vrcp.pop %v219
    %v228 = vmul.f32 1.0, %v227
    %v229 = vrcp.pop %v226
    %v230 = vmul.f32 1.0, %v229
    %v231 = vmul.f32 %v103, %v228
    %v232 = vmul.f32 %v104, %v228
    %v233 = vmul.f32 %v105, %v228
    %v234 = vmul.f32 %v106, %v228
    %v235 = vmul.f32 %v107, %v228
    %v236 = vmul.f32 %v108, %v228
    %v237 = vmul.f32 %v109, %v228
    %v238 = vmul.f32 %v110, %v228
    %v239 = vmul.f32 %v111, %v228
    %v240 = vmul.f32 %v112, %v228
    %v241 = vmul.f32 %v113, %v228
    %v242 = vmul.f32 %v114, %v228
    %v243 = vmul.f32 %v115, %v230
    %v244 = vmul.f32 %v116, %v230
    %v245 = vmul.f32 %v117, %v230
    %v246 = vmul.f32 %v118, %v230
    %v247 = vmul.f32 %v119, %v230
    %v248 = vmul.f32 %v120, %v230
    %v249 = vmul.f32 %v121, %v230
    %v250 = vmul.f32 %v122, %v230
    %v251 = vmul.f32 %v123, %v230
    %v252 = vmul.f32 %v124, %v230
    %v253 = vmul.f32 %v125, %v230
    %v254 = vmul.f32 %v126, %v230
    %v255 = vld [vmem:[%s1] sm:$0x1]
    %v257 = vlaneseq
    %v258 = vshrl.u32 %v257, 7
    %v259 = vsub.s32 0, %v258
    %v260 = vrot.slane %v255, %v259
    %v262 = vmul.f32 %v231, %v260
    %v263 = vmul.f32 %v232, %v260
    %v264 = vmul.f32 %v233, %v260
    %v265 = vmul.f32 %v234, %v260
    %v266 = vmul.f32 %v235, %v260
    %v267 = vmul.f32 %v236, %v260
    %v268 = vmul.f32 %v237, %v260
    %v269 = vmul.f32 %v238, %v260
    %v270 = vmul.f32 %v239, %v260
    %v271 = vmul.f32 %v240, %v260
    %v272 = vmul.f32 %v241, %v260
    %v273 = vmul.f32 %v242, %v260
    %v274 = vmul.f32 %v243, %v260
    %v275 = vmul.f32 %v244, %v260
    %v276 = vmul.f32 %v245, %v260
    %v277 = vmul.f32 %v246, %v260
    %v278 = vmul.f32 %v247, %v260
    %v279 = vmul.f32 %v248, %v260
    %v280 = vmul.f32 %v249, %v260
    %v281 = vmul.f32 %v250, %v260
    %v282 = vmul.f32 %v251, %v260
    %v283 = vmul.f32 %v252, %v260
    %v284 = vmul.f32 %v253, %v260
    %v285 = vmul.f32 %v254, %v260
    %v286 = vld [vmem:[%s2] sm:$0x1]
    %v288 = vlaneseq
    %v289 = vshrl.u32 %v288, 7
    %v290 = vsub.s32 0, %v289
    %v291 = vrot.slane %v286, %v290
    %v293 = vadd.f32 %v262, %v291
    %v294 = vadd.f32 %v263, %v291
    %v295 = vadd.f32 %v264, %v291
    %v296 = vadd.f32 %v265, %v291
    %v297 = vadd.f32 %v266, %v291
    %v298 = vadd.f32 %v267, %v291
    %v299 = vadd.f32 %v268, %v291
    %v300 = vadd.f32 %v269, %v291
    %v301 = vadd.f32 %v270, %v291
    %v302 = vadd.f32 %v271, %v291
    %v303 = vadd.f32 %v272, %v291
    %v304 = vadd.f32 %v273, %v291
    %v305 = vadd.f32 %v274, %v291
    %v306 = vadd.f32 %v275, %v291
    %v307 = vadd.f32 %v276, %v291
    %v308 = vadd.f32 %v277, %v291
    %v309 = vadd.f32 %v278, %v291
    %v310 = vadd.f32 %v279, %v291
    %v311 = vadd.f32 %v280, %v291
    %v312 = vadd.f32 %v281, %v291
    %v313 = vadd.f32 %v282, %v291
    %v314 = vadd.f32 %v283, %v291
    %v315 = vadd.f32 %v284, %v291
    %v316 = vadd.f32 %v285, %v291
    %317 = vst.msk [vmem:[%s3] sm:$0xff] %vm41, %v293
    %318 = vst.msk [vmem:[%s3 + $0x8] sm:$0xff] %vm41, %v294
    %319 = vst.msk [vmem:[%s3 + $0x10] sm:$0xff] %vm41, %v295
    %320 = vst.msk [vmem:[%s3 + $0x18] sm:$0xff] %vm41, %v296
    %321 = vst.msk [vmem:[%s3 + $0x20] sm:$0xff] %vm41, %v297
    %322 = vst.msk [vmem:[%s3 + $0x28] sm:$0xff] %vm41, %v298
    %323 = vst.msk [vmem:[%s3 + $0x30] sm:$0xff] %vm41, %v299
    %324 = vst.msk [vmem:[%s3 + $0x38] sm:$0xff] %vm41, %v300
    %325 = vst.msk [vmem:[%s3 + $0x40] sm:$0xff] %vm41, %v301
    %326 = vst.msk [vmem:[%s3 + $0x48] sm:$0xff] %vm41, %v302
    %327 = vst.msk [vmem:[%s3 + $0x50] sm:$0xff] %vm41, %v303
    %328 = vst.msk [vmem:[%s3 + $0x58] sm:$0xff] %vm41, %v304
    %329 = vst.msk [vmem:[%s3 + $0x60] sm:$0xff] %vm41, %v305
    %330 = vst.msk [vmem:[%s3 + $0x68] sm:$0xff] %vm41, %v306
    %331 = vst.msk [vmem:[%s3 + $0x70] sm:$0xff] %vm41, %v307
    %332 = vst.msk [vmem:[%s3 + $0x78] sm:$0xff] %vm41, %v308
    %333 = vst.msk [vmem:[%s3 + $0x80] sm:$0xff] %vm41, %v309
    %334 = vst.msk [vmem:[%s3 + $0x88] sm:$0xff] %vm41, %v310
    %335 = vst.msk [vmem:[%s3 + $0x90] sm:$0xff] %vm41, %v311
    %336 = vst.msk [vmem:[%s3 + $0x98] sm:$0xff] %vm41, %v312
    %337 = vst.msk [vmem:[%s3 + $0xa0] sm:$0xff] %vm41, %v313
    %338 = vst.msk [vmem:[%s3 + $0xa8] sm:$0xff] %vm41, %v314
    %339 = vst.msk [vmem:[%s3 + $0xb0] sm:$0xff] %vm41, %v315
    %340 = vst.msk [vmem:[%s3 + $0xb8] sm:$0xff] %vm41, %v316
    %vm341 = vcmask 1040384
    %v342 = vsel %vm341, %v219, %v101
    %v343 = vsel %vm341, %v226, %v102
    %vm344 = vcmask 17408
    %345 = vst.msk [vmem:[#allocation2] sm:$0x3] %vm344, %v342
    %346 = vst.msk [vmem:[#allocation2 + $0x2] sm:$0x3] %vm344, %v343
    // Predicated region
    $region14: #{norm.1} parent=1 // pred_check
      _
    $region15: #{norm.1} parent=1 // pred_check_branch
      %348 = sbr.rel (0) target = $region17
    $region16: #{norm.1} parent=1 // pred_region
      _
    $region17: #{norm.1} parent=1 // pred_fallthru
      _
    // Predicated region
    $region18: #{norm.1} parent=1 // pred_check
      _
    $region19: #{norm.1} parent=1 // pred_check_branch
      %350 = sbr.rel (0) target = $region21
    $region20: #{norm.1} parent=1 // pred_region
      %s352 = ssub.s32 64, 64
      %353 = vsyncadd [#allocation3], %s352
      %s354 = sshll.u32 [#allocation2], 4
      %s355 = int_to_ptr.vmem [resolvable:$true] %s354
      %360 = dma.vmem_to_hbm [thread:$0]  %s355, 64, %s4, [#allocation3], 32, 32, 2
    $region21: #{norm.1} parent=1 // pred_fallthru
      _
    // Predicated region
    $region22: #{norm.1} parent=1 // pred_check
      _
    $region23: #{norm.1} parent=1 // pred_check_branch
      %362 = sbr.rel (0) target = $region25
    $region24: #{norm.1} parent=1 // pred_region
      _
    $region25: #{norm.1} parent=1 // pred_fallthru
      _
    // Predicated region
    $region26: #{norm.1} parent=1 // pred_check
      _
    $region27: #{norm.1} parent=1 // pred_check_branch
      %364 = sbr.rel (0) target = $region29
    $region28: #{norm.1} parent=1 // pred_region
      %365 = dma.done [#allocation3], 64
    $region29: #{norm.1} parent=1 // pred_fallthru
      _
    %366 = vsyncpa [#allocation3], 1

</llo_original>
